<compile_context>
chip_gen: v7x
topology: tpu7x:2x2x1
jax: 0.10.0
libtpu: 0.0.40
codegen_flags: <defaults>
</compile_context>

<pallas_src>
import math

import jax
import jax.numpy as jnp
from jax.experimental import pallas as pl
from jax.experimental.pallas import tpu as pltpu


def _predictor_kernel(x_ref, w_ref, m_ref, e_ref, o_ref):
    # x_ref: (tile, pack*D)   f32   packed data rows
    # w_ref: (pack*D, pack*T) bf16  kron(I_pack, W^T), VMEM-resident
    # m_ref: (tile, pack)     f32   one mask value per original row
    # e_ref: (pack, pack*T)   bf16  0/1 expansion matrix kron(I_pack, 1_T), resident
    # o_ref: (tile, pack*T)   f32   lane-dense output
    x = x_ref[...].astype(jnp.bfloat16)  # single-pass MXU; kernel stays HBM-bound
    logits = jnp.dot(x, w_ref[...], preferred_element_type=jnp.float32)
    # Expand per-row mask to the packed 128-lane layout on the MXU (exact: 0/1).
    mask = jnp.dot(m_ref[...].astype(jnp.bfloat16), e_ref[...],
                   preferred_element_type=jnp.float32)
    o_ref[...] = (logits * mask).astype(o_ref.dtype)


def predictor_forward(data, weight, non_pad_mask, *, tile_rows=2048):
    """data: [B, S, D] f32, weight: [T, D] f32 (PyTorch nn.Linear layout),
    non_pad_mask: [B, S, 1] f32  ->  [B, S, T] f32."""
    B, S, D = data.shape
    T = weight.shape[0]
    M = B * S

    # Row-packing factor so the output's last dim is 128 lanes when possible.
    pack = 128 // T if (0 < T <= 128 and 128 % T == 0) else 1

    data2d = data.reshape(M, D)
    mask2d = non_pad_mask.reshape(M, 1)

    # Pad only up to a multiple of `pack` (<= pack-1 rows) so the row-major
    # packing reshape is valid.  No grid-level padding.
    M_pad = pack * pl.cdiv(M, pack)
    if M_pad != M:
        # TODO(synk): guarantee B*S % pack == 0 upstream to drop this copy.
        data2d = jnp.pad(data2d, ((0, M_pad - M), (0, 0)))
        mask2d = jnp.pad(mask2d, ((0, M_pad - M), (0, 0)))
    P = M_pad // pack

    x_packed = data2d.reshape(P, pack * D)   # free row-major reshape
    m_packed = mask2d.reshape(P, pack)       # free row-major reshape

    # Small resident constants (constant index_map keeps them in VMEM).
    w_big = jnp.kron(jnp.eye(pack, dtype=jnp.float32),
                     weight.T.astype(jnp.float32)).astype(jnp.bfloat16)
    expand = jnp.kron(jnp.eye(pack, dtype=jnp.float32),
                      jnp.ones((1, T), jnp.float32)).astype(jnp.bfloat16)

    # Tile selection: big tiles to amortize per-step overhead; cap at 2048 so
    # double-buffered VMEM fits v5e default scoped limit; keep >=2 grid steps
    # when there is enough work so v7x megacore can use both TensorCores.
    tile_rows = max(8, (tile_rows // 8) * 8)
    tile_rows = min(tile_rows, 2048)
    if P <= 8:
        tile = P                              # single block == full array rows
    else:
        tile = min(tile_rows, (P // 8) * 8)   # multiple of 8 -> (8,128) rule
        if pl.cdiv(P, tile) < 2 and P >= 16:
            tile = max(8, (P // 2) // 8 * 8)  # force >=2 steps (megacore)
    grid = pl.cdiv(P, tile)

    out_packed = pl.pallas_call(
        _predictor_kernel,
        out_shape=jax.ShapeDtypeStruct((P, pack * T), data.dtype),
        grid_spec=pltpu.PrefetchScalarGridSpec(
            num_scalar_prefetch=0,
            grid=(grid,),
            in_specs=[
                pl.BlockSpec((tile, pack * D), lambda i: (i, 0)),      # data tile
                pl.BlockSpec((pack * D, pack * T), lambda i: (0, 0)),  # weight (resident)
                pl.BlockSpec((tile, pack), lambda i: (i, 0)),          # mask tile
                pl.BlockSpec((pack, pack * T), lambda i: (0, 0)),      # expander (resident)
            ],
            out_specs=pl.BlockSpec((tile, pack * T), lambda i: (i, 0)),
        ),
        compiler_params=pltpu.CompilerParams(
            dimension_semantics=("parallel",)),
        cost_estimate=pl.CostEstimate(
            flops=2 * P * (pack * D) * (pack * T) + 2 * P * pack * (pack * T),
            transcendentals=0,
            bytes_accessed=4 * P * (pack * D + pack + pack * T)
                           + 2 * pack * pack * (D * T + T)),
    )(x_packed, w_big, m_packed, expand)

    # Packed (P, pack*T) row-major == (M_pad, T) row-major; drop padded rows.
    out = out_packed.reshape(M_pad, T)[:M]
    return out.reshape(B, S, T)


if __name__ == "__main__":
    # Small shapes consistent with the module: batch=2, seq=8, dim=32, num_types=8
    B, S, D, T = 2, 8, 32, 8
    key = jax.random.PRNGKey(0)
    k_data, k_w, k_mask = jax.random.split(key, 3)

    data = jax.random.normal(k_data, (B, S, D), dtype=jnp.float32)

    # Deterministic xavier_normal_ init for nn.Linear(dim, num_types, bias=False):
    # weight shape (num_types, dim); std = sqrt(2 / (fan_in + fan_out))
    std = math.sqrt(2.0 / (D + T))
    weight = std * jax.random.normal(k_w, (T, D), dtype=jnp.float32)

    # non_pad_mask: [B, S, 1], 1.0 for valid positions, 0.0 for padding
    non_pad_mask = (jax.random.uniform(k_mask, (B, S, 1)) > 0.25).astype(jnp.float32)

    fwd = jax.jit(predictor_forward)
    out = jax.block_until_ready(fwd(data, weight, non_pad_mask))

    # Reference with the same numerics as the kernel (bf16 operands, f32 accum).
    ref = jnp.einsum(
        "bsd,td->bst",
        data.astype(jnp.bfloat16).astype(jnp.float32),
        weight.astype(jnp.bfloat16).astype(jnp.float32),
        precision=jax.lax.Precision.HIGHEST) * non_pad_mask

    assert out.shape == (B, S, T)
    assert jnp.allclose(out, ref, atol=1e-4, rtol=1e-4), \
        float(jnp.max(jnp.abs(out - ref)))

    print("KERNEL_OK")
</pallas_src>

<mosaic_0001>
module attributes {stable_mosaic.version = 11 : i64} {
  func.func @_predictor_kernel(%arg0: i32, %arg1: memref<1x512xf32, #tpu.memory_space<vmem>>, %arg2: memref<512x128xbf16, #tpu.memory_space<vmem>>, %arg3: memref<1x16xf32, #tpu.memory_space<vmem>>, %arg4: memref<16x128xbf16, #tpu.memory_space<vmem>>, %arg5: memref<1x128xf32, #tpu.memory_space<vmem>>) attributes {dimension_semantics = [#tpu.dimension_semantics<parallel>], iteration_bounds = array<i64: 1>, scalar_prefetch = 0 : i64, scratch_operands = 0 : i64, tpu.core_type = #tpu.core_type<tc>, window_params = [{transform_indices = @transform_0, window_bounds = array<i64: 1, 512>}, {pipeline_mode = #tpu.pipeline_mode<synchronous>, transform_indices = @transform_1, window_bounds = array<i64: 512, 128>}, {transform_indices = @transform_2, window_bounds = array<i64: 1, 16>}, {pipeline_mode = #tpu.pipeline_mode<synchronous>, transform_indices = @transform_3, window_bounds = array<i64: 16, 128>}, {transform_indices = @transform_4, window_bounds = array<i64: 1, 128>}]} {
    %c0 = arith.constant 0 : index
    %c0_0 = arith.constant 0 : index
    %0 = vector.load %arg1[%c0, %c0_0] : memref<1x512xf32, #tpu.memory_space<vmem>>, vector<1x512xf32>
    %1 = arith.truncf %0 : vector<1x512xf32> to vector<1x512xbf16>
    %c0_1 = arith.constant 0 : index
    %c0_2 = arith.constant 0 : index
    %2 = vector.load %arg2[%c0_1, %c0_2] : memref<512x128xbf16, #tpu.memory_space<vmem>>, vector<512x128xbf16>
    %cst = arith.constant dense<0.000000e+00> : vector<1x128xf32>
    %3 = tpu.matmul %1, %2, %cst {dimension_numbers = #tpu.dot_dimension_numbers<[1], [0], [0], [1], [0, 0, 1, 1], [], []>} : vector<1x512xbf16>, vector<512x128xbf16>, vector<1x128xf32> -> vector<1x128xf32>
    %c0_3 = arith.constant 0 : index
    %c0_4 = arith.constant 0 : index
    %4 = vector.load %arg3[%c0_3, %c0_4] : memref<1x16xf32, #tpu.memory_space<vmem>>, vector<1x16xf32>
    %5 = arith.truncf %4 : vector<1x16xf32> to vector<1x16xbf16>
    %c0_5 = arith.constant 0 : index
    %c0_6 = arith.constant 0 : index
    %6 = vector.load %arg4[%c0_5, %c0_6] : memref<16x128xbf16, #tpu.memory_space<vmem>>, vector<16x128xbf16>
    %cst_7 = arith.constant dense<0.000000e+00> : vector<1x128xf32>
    %7 = tpu.matmul %5, %6, %cst_7 {dimension_numbers = #tpu.dot_dimension_numbers<[1], [0], [0], [1], [0, 0, 1, 1], [], []>} : vector<1x16xbf16>, vector<16x128xbf16>, vector<1x128xf32> -> vector<1x128xf32>
    %8 = arith.mulf %3, %7 : vector<1x128xf32>
    %c0_8 = arith.constant 0 : index
    %c0_9 = arith.constant 0 : index
    %9 = vector.load %arg5[%c0_8, %c0_9] : memref<1x128xf32, #tpu.memory_space<vmem>>, vector<1x128xf32>
    tpu.vector_store %arg5[%c0_8, %c0_9], %8 {strides = array<i32>} : memref<1x128xf32, #tpu.memory_space<vmem>>, vector<1x128xf32>,
    return
  }
  func.func @transform_0(%arg0: i32) -> (i32, i32) {
    %c0_i32 = arith.constant 0 : i32
    %c0_i32_0 = arith.constant 0 : i32
    return %arg0, %c0_i32 : i32, i32
  }
  func.func @transform_1(%arg0: i32) -> (i32, i32) {
    %c0_i32 = arith.constant 0 : i32
    %c0_i32_0 = arith.constant 0 : i32
    %c0_i32_1 = arith.constant 0 : i32
    return %c0_i32, %c0_i32_0 : i32, i32
  }
  func.func @transform_2(%arg0: i32) -> (i32, i32) {
    %c0_i32 = arith.constant 0 : i32
    %c0_i32_0 = arith.constant 0 : i32
    return %arg0, %c0_i32 : i32, i32
  }
  func.func @transform_3(%arg0: i32) -> (i32, i32) {
    %c0_i32 = arith.constant 0 : i32
    %c0_i32_0 = arith.constant 0 : i32
    %c0_i32_1 = arith.constant 0 : i32
    return %c0_i32, %c0_i32_0 : i32, i32
  }
  func.func @transform_4(%arg0: i32) -> (i32, i32) {
    %c0_i32 = arith.constant 0 : i32
    %c0_i32_0 = arith.constant 0 : i32
    return %arg0, %c0_i32 : i32, i32
  }
}

</mosaic_0001>

<llo_original>
// kernel: predictor_forward.1
$region0: #{predictor_forward.1}
  #allocation0 [shape = 'u32[]', space=smem, size = 0x4, offset = 0x4, fixed_abs, tag = 'smem constant byte address 0x4 - core index']
  #allocation1 [shape = 'u32[144,128]{1,0:T(1,128)}', space=vmem, size = 0x12000, scoped, tag = 'internal scratch']
  %s0 = inlined_call_operand.vmem [shape: f32[1,512], index: 0, kind: input, shape index: {}]
  %s1 = inlined_call_operand.vmem [shape: bf16[512,128], index: 1, kind: input, shape index: {}]
  %s2 = inlined_call_operand.vmem [shape: f32[1,16], index: 2, kind: input, shape index: {}]
  %s3 = inlined_call_operand.vmem [shape: bf16[16,128], index: 3, kind: input, shape index: {}]
  %s4 = inlined_call_operand.vmem [shape: f32[1,128], index: 4, kind: output, shape index: {}]
  %s5 = sld [smem:[#allocation0]]
  $region26: #{predictor_forward.1} parent=0
    _
  %s7 = ssub.s32 1, %s5
  %s8 = scalar_select 0, %s7, %s5
  // Predicated region
  $region2: #{predictor_forward.1} parent=0 // pred_check
    _
  $region3: #{predictor_forward.1} parent=0 // pred_check_branch
    %10 = sbr.rel (0) target = $region5
  $region4: #{predictor_forward.1} parent=0 // pred_region
    _
  $region5: #{predictor_forward.1} parent=0 // pred_fallthru
    _
  // Predicated region
  $region6: #{predictor_forward.1} parent=0 // pred_check
    _
  $region7: #{predictor_forward.1} parent=0 // pred_check_branch
    %12 = sbr.rel (0) target = $region9
  $region8: #{predictor_forward.1} parent=0 // pred_region
    _
  $region9: #{predictor_forward.1} parent=0 // pred_fallthru
    _
  // Predicated region
  $region10: #{predictor_forward.1} parent=0 // pred_check
    _
  $region11: #{predictor_forward.1} parent=0 // pred_check_branch
    %14 = sbr.rel (0) target = $region13
  $region12: #{predictor_forward.1} parent=0 // pred_region
    _
  $region13: #{predictor_forward.1} parent=0 // pred_fallthru
    _
  // Predicated region
  $region14: #{predictor_forward.1} parent=0 // pred_check
    _
  $region15: #{predictor_forward.1} parent=0 // pred_check_branch
    %16 = sbr.rel (0) target = $region17
  $region16: #{predictor_forward.1} parent=0 // pred_region
    _
  $region17: #{predictor_forward.1} parent=0 // pred_fallthru
    _
  %v18 = vld [vmem:[%s0] sm:$0xf]
  %v20 = vlaneseq
  %v21 = vshrl.u32 %v20, 7
  %v22 = vsub.s32 0, %v21
  %v23 = vrot.slane %v18, %v22
  %v24 = vlaneseq
  %v25 = vshrl.u32 %v24, 7
  %v26 = vsub.s32 1, %v25
  %v27 = vrot.slane %v18, %v26
  %v28 = vlaneseq
  %v29 = vshrl.u32 %v28, 7
  %v30 = vsub.s32 2, %v29
  %v31 = vrot.slane %v18, %v30
  %v32 = vlaneseq
  %v33 = vshrl.u32 %v32, 7
  %v34 = vsub.s32 3, %v33
  %v35 = vrot.slane %v18, %v34
  %v40 = vpack.c.bf16 %v23, %v23
  %v41 = vpack.c.bf16 %v27, %v27
  %v42 = vpack.c.bf16 %v31, %v31
  %v43 = vpack.c.bf16 %v35, %v35
  %v44 = vld [vmem:[%s1] sm:$0xf]
  %v45 = vld [vmem:[%s1 + $0x4] sm:$0xf]
  %v46 = vld [vmem:[%s1 + $0x8] sm:$0xf]
  %v47 = vld [vmem:[%s1 + $0xc] sm:$0xf]
  %v48 = vld [vmem:[%s1 + $0x10] sm:$0xf]
  %v49 = vld [vmem:[%s1 + $0x14] sm:$0xf]
  %v50 = vld [vmem:[%s1 + $0x18] sm:$0xf]
  %v51 = vld [vmem:[%s1 + $0x1c] sm:$0xf]
  %v52 = vld [vmem:[%s1 + $0x20] sm:$0xf]
  %v53 = vld [vmem:[%s1 + $0x24] sm:$0xf]
  %v54 = vld [vmem:[%s1 + $0x28] sm:$0xf]
  %v55 = vld [vmem:[%s1 + $0x2c] sm:$0xf]
  %v56 = vld [vmem:[%s1 + $0x30] sm:$0xf]
  %v57 = vld [vmem:[%s1 + $0x34] sm:$0xf]
  %v58 = vld [vmem:[%s1 + $0x38] sm:$0xf]
  %v59 = vld [vmem:[%s1 + $0x3c] sm:$0xf]
  %v60 = vld [vmem:[%s1 + $0x40] sm:$0xf]
  %v61 = vld [vmem:[%s1 + $0x44] sm:$0xf]
  %v62 = vld [vmem:[%s1 + $0x48] sm:$0xf]
  %v63 = vld [vmem:[%s1 + $0x4c] sm:$0xf]
  %v64 = vld [vmem:[%s1 + $0x50] sm:$0xf]
  %v65 = vld [vmem:[%s1 + $0x54] sm:$0xf]
  %v66 = vld [vmem:[%s1 + $0x58] sm:$0xf]
  %v67 = vld [vmem:[%s1 + $0x5c] sm:$0xf]
  %v68 = vld [vmem:[%s1 + $0x60] sm:$0xf]
  %v69 = vld [vmem:[%s1 + $0x64] sm:$0xf]
  %v70 = vld [vmem:[%s1 + $0x68] sm:$0xf]
  %v71 = vld [vmem:[%s1 + $0x6c] sm:$0xf]
  %v72 = vld [vmem:[%s1 + $0x70] sm:$0xf]
  %v73 = vld [vmem:[%s1 + $0x74] sm:$0xf]
  %v74 = vld [vmem:[%s1 + $0x78] sm:$0xf]
  %v75 = vld [vmem:[%s1 + $0x7c] sm:$0xf]
  %v76 = vld [vmem:[%s1 + $0x80] sm:$0xf]
  %v77 = vld [vmem:[%s1 + $0x84] sm:$0xf]
  %v78 = vld [vmem:[%s1 + $0x88] sm:$0xf]
  %v79 = vld [vmem:[%s1 + $0x8c] sm:$0xf]
  %v80 = vld [vmem:[%s1 + $0x90] sm:$0xf]
  %v81 = vld [vmem:[%s1 + $0x94] sm:$0xf]
  %v82 = vld [vmem:[%s1 + $0x98] sm:$0xf]
  %v83 = vld [vmem:[%s1 + $0x9c] sm:$0xf]
  %v84 = vld [vmem:[%s1 + $0xa0] sm:$0xf]
  %v85 = vld [vmem:[%s1 + $0xa4] sm:$0xf]
  %v86 = vld [vmem:[%s1 + $0xa8] sm:$0xf]
  %v87 = vld [vmem:[%s1 + $0xac] sm:$0xf]
  %v88 = vld [vmem:[%s1 + $0xb0] sm:$0xf]
  %v89 = vld [vmem:[%s1 + $0xb4] sm:$0xf]
  %v90 = vld [vmem:[%s1 + $0xb8] sm:$0xf]
  %v91 = vld [vmem:[%s1 + $0xbc] sm:$0xf]
  %v92 = vld [vmem:[%s1 + $0xc0] sm:$0xf]
  %v93 = vld [vmem:[%s1 + $0xc4] sm:$0xf]
  %v94 = vld [vmem:[%s1 + $0xc8] sm:$0xf]
  %v95 = vld [vmem:[%s1 + $0xcc] sm:$0xf]
  %v96 = vld [vmem:[%s1 + $0xd0] sm:$0xf]
  %v97 = vld [vmem:[%s1 + $0xd4] sm:$0xf]
  %v98 = vld [vmem:[%s1 + $0xd8] sm:$0xf]
  %v99 = vld [vmem:[%s1 + $0xdc] sm:$0xf]
  %v100 = vld [vmem:[%s1 + $0xe0] sm:$0xf]
  %v101 = vld [vmem:[%s1 + $0xe4] sm:$0xf]
  %v102 = vld [vmem:[%s1 + $0xe8] sm:$0xf]
  %v103 = vld [vmem:[%s1 + $0xec] sm:$0xf]
  %v104 = vld [vmem:[%s1 + $0xf0] sm:$0xf]
  %v105 = vld [vmem:[%s1 + $0xf4] sm:$0xf]
  %v106 = vld [vmem:[%s1 + $0xf8] sm:$0xf]
  %v107 = vld [vmem:[%s1 + $0xfc] sm:$0xf]
  %v172 = vunpack.c.l.b16 %v44
  %v173 = vunpack.c.l.b16 %v45
  %v174 = vunpack.c.l.b16 %v46
  %v175 = vunpack.c.l.b16 %v47
  %v176 = vunpack.c.l.b16 %v48
  %v177 = vunpack.c.l.b16 %v49
  %v178 = vunpack.c.l.b16 %v50
  %v179 = vunpack.c.l.b16 %v51
  %v180 = vunpack.c.l.b16 %v52
  %v181 = vunpack.c.l.b16 %v53
  %v182 = vunpack.c.l.b16 %v54
  %v183 = vunpack.c.l.b16 %v55
  %v184 = vunpack.c.l.b16 %v56
  %v185 = vunpack.c.l.b16 %v57
  %v186 = vunpack.c.l.b16 %v58
  %v187 = vunpack.c.l.b16 %v59
  %v188 = vunpack.c.l.b16 %v60
  %v189 = vunpack.c.l.b16 %v61
  %v190 = vunpack.c.l.b16 %v62
  %v191 = vunpack.c.l.b16 %v63
  %v192 = vunpack.c.l.b16 %v64
  %v193 = vunpack.c.l.b16 %v65
  %v194 = vunpack.c.l.b16 %v66
  %v195 = vunpack.c.l.b16 %v67
  %v196 = vunpack.c.l.b16 %v68
  %v197 = vunpack.c.l.b16 %v69
  %v198 = vunpack.c.l.b16 %v70
  %v199 = vunpack.c.l.b16 %v71
  %v200 = vunpack.c.l.b16 %v72
  %v201 = vunpack.c.l.b16 %v73
  %v202 = vunpack.c.l.b16 %v74
  %v203 = vunpack.c.l.b16 %v75
  %v204 = vunpack.c.l.b16 %v76
  %v205 = vunpack.c.l.b16 %v77
  %v206 = vunpack.c.l.b16 %v78
  %v207 = vunpack.c.l.b16 %v79
  %v208 = vunpack.c.l.b16 %v80
  %v209 = vunpack.c.l.b16 %v81
  %v210 = vunpack.c.l.b16 %v82
  %v211 = vunpack.c.l.b16 %v83
  %v212 = vunpack.c.l.b16 %v84
  %v213 = vunpack.c.l.b16 %v85
  %v214 = vunpack.c.l.b16 %v86
  %v215 = vunpack.c.l.b16 %v87
  %v216 = vunpack.c.l.b16 %v88
  %v217 = vunpack.c.l.b16 %v89
  %v218 = vunpack.c.l.b16 %v90
  %v219 = vunpack.c.l.b16 %v91
  %v220 = vunpack.c.l.b16 %v92
  %v221 = vunpack.c.l.b16 %v93
  %v222 = vunpack.c.l.b16 %v94
  %v223 = vunpack.c.l.b16 %v95
  %v224 = vunpack.c.l.b16 %v96
  %v225 = vunpack.c.l.b16 %v97
  %v226 = vunpack.c.l.b16 %v98
  %v227 = vunpack.c.l.b16 %v99
  %v228 = vunpack.c.l.b16 %v100
  %v229 = vunpack.c.l.b16 %v101
  %v230 = vunpack.c.l.b16 %v102
  %v231 = vunpack.c.l.b16 %v103
  %v232 = vunpack.c.l.b16 %v104
  %v233 = vunpack.c.l.b16 %v105
  %v234 = vunpack.c.l.b16 %v106
  %v235 = vunpack.c.l.b16 %v107
  %v236 = vpack.c.b16 %v173, %v172
  %v237 = vpack.c.b16 %v175, %v174
  %v238 = vpack.c.b16 %v177, %v176
  %v239 = vpack.c.b16 %v179, %v178
  %v240 = vpack.c.b16 %v181, %v180
  %v241 = vpack.c.b16 %v183, %v182
  %v242 = vpack.c.b16 %v185, %v184
  %v243 = vpack.c.b16 %v187, %v186
  %v244 = vpack.c.b16 %v189, %v188
  %v245 = vpack.c.b16 %v191, %v190
  %v246 = vpack.c.b16 %v193, %v192
  %v247 = vpack.c.b16 %v195, %v194
  %v248 = vpack.c.b16 %v197, %v196
  %v249 = vpack.c.b16 %v199, %v198
  %v250 = vpack.c.b16 %v201, %v200
  %v251 = vpack.c.b16 %v203, %v202
  %v252 = vpack.c.b16 %v205, %v204
  %v253 = vpack.c.b16 %v207, %v206
  %v254 = vpack.c.b16 %v209, %v208
  %v255 = vpack.c.b16 %v211, %v210
  %v256 = vpack.c.b16 %v213, %v212
  %v257 = vpack.c.b16 %v215, %v214
  %v258 = vpack.c.b16 %v217, %v216
  %v259 = vpack.c.b16 %v219, %v218
  %v260 = vpack.c.b16 %v221, %v220
  %v261 = vpack.c.b16 %v223, %v222
  %v262 = vpack.c.b16 %v225, %v224
  %v263 = vpack.c.b16 %v227, %v226
  %v264 = vpack.c.b16 %v229, %v228
  %v265 = vpack.c.b16 %v231, %v230
  %v266 = vpack.c.b16 %v233, %v232
  %v267 = vpack.c.b16 %v235, %v234
  %300 = vmatprep.subr.bf16.mxu0 0
  %301 = vmatpush1.bf16.msra.mxu0 %v236
  %302 = vmatprep.subr.bf16.mxu0 0
  %303 = vmatpush1.bf16.msra.mxu0 %v237
  %304 = vmatprep.subr.bf16.mxu0 0
  %305 = vmatpush1.bf16.msra.mxu0 %v238
  %306 = vmatprep.subr.bf16.mxu0 0
  %307 = vmatpush1.bf16.msra.mxu0 %v239
  %308 = vmatprep.subr.bf16.mxu0 0
  %309 = vmatpush1.bf16.msra.mxu0 %v240
  %310 = vmatprep.subr.bf16.mxu0 0
  %311 = vmatpush1.bf16.msra.mxu0 %v241
  %312 = vmatprep.subr.bf16.mxu0 0
  %313 = vmatpush1.bf16.msra.mxu0 %v242
  %314 = vmatprep.subr.bf16.mxu0 0
  %315 = vmatpush1.bf16.msra.mxu0 %v243
  %316 = vmatprep.subr.bf16.mxu0 0
  %317 = vmatpush1.bf16.msra.mxu0 %v244
  %318 = vmatprep.subr.bf16.mxu0 0
  %319 = vmatpush1.bf16.msra.mxu0 %v245
  %320 = vmatprep.subr.bf16.mxu0 0
  %321 = vmatpush1.bf16.msra.mxu0 %v246
  %322 = vmatprep.subr.bf16.mxu0 0
  %323 = vmatpush1.bf16.msra.mxu0 %v247
  %324 = vmatprep.subr.bf16.mxu0 0
  %325 = vmatpush1.bf16.msra.mxu0 %v248
  %326 = vmatprep.subr.bf16.mxu0 0
  %327 = vmatpush1.bf16.msra.mxu0 %v249
  %328 = vmatprep.subr.bf16.mxu0 0
  %329 = vmatpush1.bf16.msra.mxu0 %v250
  %330 = vmatprep.subr.bf16.mxu0 0
  %331 = vmatpush1.bf16.msra.mxu0 %v251
  %332 = vmatprep.mubr.bf16.mxu0 %v41
  %333 = vmatmul.mubr.bf16.gmra.mrb[0].mxu0 %v40
  %v334 = vpop.f32.mrb[0].mxu0
  %v335 = vadd.f32 0.0, %v334
  %v336 = vpop.f32.mrb[0].mxu0
  %v337 = vpop.f32.mrb[0].mxu0
  %v338 = vpop.f32.mrb[0].mxu0
  %339 = vdwg.mxu0
  %340 = vmatprep.subr.bf16.mxu0 0
  %341 = vmatpush1.bf16.msra.mxu0 %v252
  %342 = vmatprep.subr.bf16.mxu0 0
  %343 = vmatpush1.bf16.msra.mxu0 %v253
  %344 = vmatprep.subr.bf16.mxu0 0
  %345 = vmatpush1.bf16.msra.mxu0 %v254
  %346 = vmatprep.subr.bf16.mxu0 0
  %347 = vmatpush1.bf16.msra.mxu0 %v255
  %348 = vmatprep.subr.bf16.mxu0 0
  %349 = vmatpush1.bf16.msra.mxu0 %v256
  %350 = vmatprep.subr.bf16.mxu0 0
  %351 = vmatpush1.bf16.msra.mxu0 %v257
  %352 = vmatprep.subr.bf16.mxu0 0
  %353 = vmatpush1.bf16.msra.mxu0 %v258
  %354 = vmatprep.subr.bf16.mxu0 0
  %355 = vmatpush1.bf16.msra.mxu0 %v259
  %356 = vmatprep.subr.bf16.mxu0 0
  %357 = vmatpush1.bf16.msra.mxu0 %v260
  %358 = vmatprep.subr.bf16.mxu0 0
  %359 = vmatpush1.bf16.msra.mxu0 %v261
  %360 = vmatprep.subr.bf16.mxu0 0
  %361 = vmatpush1.bf16.msra.mxu0 %v262
  %362 = vmatprep.subr.bf16.mxu0 0
  %363 = vmatpush1.bf16.msra.mxu0 %v263
  %364 = vmatprep.subr.bf16.mxu0 0
  %365 = vmatpush1.bf16.msra.mxu0 %v264
  %366 = vmatprep.subr.bf16.mxu0 0
  %367 = vmatpush1.bf16.msra.mxu0 %v265
  %368 = vmatprep.subr.bf16.mxu0 0
  %369 = vmatpush1.bf16.msra.mxu0 %v266
  %370 = vmatprep.subr.bf16.mxu0 0
  %371 = vmatpush1.bf16.msra.mxu0 %v267
  %372 = vmatprep.mubr.bf16.mxu0 %v43
  %373 = vmatmul.mubr.bf16.gmra.mrb[0].mxu0 %v42
  %v374 = vpop.f32.mrb[0].mxu0
  %v375 = vadd.f32 %v335, %v374
  %v376 = vpop.f32.mrb[0].mxu0
  %v377 = vpop.f32.mrb[0].mxu0
  %v378 = vpop.f32.mrb[0].mxu0
  %379 = vdwg.mxu0
  %v380 = vld [vmem:[%s2] sm:$0x1]
  %v381 = vpack.c.bf16 %v380, %v380
  %v382 = vld [vmem:[%s3] sm:$0xf]
  %v383 = vld [vmem:[%s3 + $0x4] sm:$0xf]
  %v386 = vunpack.c.l.b16 %v382
  %v387 = vunpack.c.l.b16 %v383
  %v388 = vpack.c.b16 %v387, %v386
  %vm390 = vcmask 130048
  %v392 = vsel %vm390, %v381, 0
  %394 = vmatprep.subr.bf16.mxu0 0
  %395 = vmatpush1.bf16.msra.mxu0 %v388
  %396 = vmatprep.subr.bf16.mxu0 0
  %397 = vmatpush1.bf16.msra.mxu0 0
  %398 = vmatprep.subr.bf16.mxu0 0
  %399 = vmatpush1.bf16.msra.mxu0 0
  %400 = vmatprep.subr.bf16.mxu0 0
  %401 = vmatpush1.bf16.msra.mxu0 0
  %402 = vmatprep.subr.bf16.mxu0 0
  %403 = vmatpush1.bf16.msra.mxu0 0
  %404 = vmatprep.subr.bf16.mxu0 0
  %405 = vmatpush1.bf16.msra.mxu0 0
  %406 = vmatprep.subr.bf16.mxu0 0
  %407 = vmatpush1.bf16.msra.mxu0 0
  %408 = vmatprep.subr.bf16.mxu0 0
  %409 = vmatpush1.bf16.msra.mxu0 0
  %410 = vmatprep.subr.bf16.mxu0 0
  %411 = vmatpush1.bf16.msra.mxu0 0
  %412 = vmatprep.subr.bf16.mxu0 0
  %413 = vmatpush1.bf16.msra.mxu0 0
  %414 = vmatprep.subr.bf16.mxu0 0
  %415 = vmatpush1.bf16.msra.mxu0 0
  %416 = vmatprep.subr.bf16.mxu0 0
  %417 = vmatpush1.bf16.msra.mxu0 0
  %418 = vmatprep.subr.bf16.mxu0 0
  %419 = vmatpush1.bf16.msra.mxu0 0
  %420 = vmatprep.subr.bf16.mxu0 0
  %421 = vmatpush1.bf16.msra.mxu0 0
  %422 = vmatprep.subr.bf16.mxu0 0
  %423 = vmatpush1.bf16.msra.mxu0 0
  %424 = vmatprep.subr.bf16.mxu0 0
  %425 = vmatpush1.bf16.msra.mxu0 0
  %426 = vmatprep.mubr.bf16.mxu0 0
  %427 = vmatmul.mubr.bf16.gmra.mrb[0].mxu0 %v392
  %v428 = vpop.f32.mrb[0].mxu0
  %v429 = vadd.f32 0.0, %v428
  %v430 = vpop.f32.mrb[0].mxu0
  %v431 = vpop.f32.mrb[0].mxu0
  %v432 = vpop.f32.mrb[0].mxu0
  %433 = vdwg.mxu0
  %v434 = vmul.f32 %v375, %v429
  %435 = vst [vmem:[%s4] sm:$0x1] %v434
  // Predicated region
  $region18: #{predictor_forward.1} parent=0 // pred_check
    _
  $region19: #{predictor_forward.1} parent=0 // pred_check_branch
    %437 = sbr.rel (0) target = $region21
  $region20: #{predictor_forward.1} parent=0 // pred_region
    _
  $region21: #{predictor_forward.1} parent=0 // pred_fallthru
    _
  // Predicated region
  $region22: #{predictor_forward.1} parent=0 // pred_check
    _
  $region23: #{predictor_forward.1} parent=0 // pred_check_branch
    %439 = sbr.rel (0) target = $region25
  $region24: #{predictor_forward.1} parent=0 // pred_region
    _
  $region25: #{predictor_forward.1} parent=0 // pred_fallthru
    _

</llo_original>
